<compile_context>
chip_gen: v7x
topology: tpu7x:2x2x1
jax: 0.10.0
libtpu: 0.0.40
codegen_flags: <defaults>
</compile_context>

<pallas_src>
import functools

import numpy as np
import jax
import jax.numpy as jnp
from jax.experimental import pallas as pl
from jax.experimental.pallas import tpu as pltpu

WINDOW_SIZE = 11
SIGMA = 1.5
C1 = 0.01 ** 2
C2 = 0.03 ** 2


def _gaussian_1d(window_size, sigma):
    """Normalized 1D Gaussian, identical to the module's _create_window."""
    xs = np.arange(window_size, dtype=np.float64)
    g = np.exp(-((xs - window_size // 2) ** 2) / (2.0 * sigma ** 2))
    g = g / g.sum()
    return g.astype(np.float32)


def _band_matrix(n, g):
    """Banded Toeplitz M with M[i,k] = g[k-i+p].

    (M @ x) along the leading axis == 'same' zero-padded 1D correlation of x
    with g, i.e. exactly F.conv2d(padding=window_size//2) along one axis.
    """
    p = len(g) // 2
    m = np.zeros((n, n), dtype=np.float32)
    for i in range(n):
        for k in range(max(0, i - p), min(n, i + p + 1)):
            m[i, k] = g[k - i + p]
    return m


def _choose_batch_tile(B, C, W):
    """Batch elements folded into the lane axis per grid step.

    Fold enough batches to widen the lane axis (target ~256 lanes so (8,128)
    f32 vregs and the v6e/v7x MXU are well filled), but keep >= 2 grid steps
    when B >= 2 so both v7x TensorCores get work; TB must divide B so every
    block is full (no masked DMAs).
    """
    if B <= 1:
        return 1
    lane_target = max(1, -(-256 // (C * W)))        # ceil(256 / (C*W))
    tb = max(1, min(B // 2, lane_target))
    while B % tb:
        tb -= 1
    return tb


def _ssim_kernel(kh_ref, kw_ref, x1_ref, x2_ref, o_ref, s_ref, *, H):
    # x1_ref / x2_ref: (1, H, L) with L = TB*C*W lanes (batch*channel*width).
    x1 = x1_ref[0]                                   # (H, L)
    x2 = x2_ref[0]

    # Stage the five conv-input planes along sublanes at static offsets
    # (VMEM scratch; no jnp.concatenate materialization).
    s_ref[0 * H:1 * H, :] = x1
    s_ref[1 * H:2 * H, :] = x2
    s_ref[2 * H:3 * H, :] = x1 * x1
    s_ref[3 * H:4 * H, :] = x2 * x2
    s_ref[4 * H:5 * H, :] = x1 * x2

    # TODO(synk): on v6e/v7x the mu (x1/x2) passes could be cast to bf16 MXU
    # operands (f32 accumulate); keep the squared-plane passes f32 to protect
    # the E[x^2] - mu^2 cancellation.
    # Horizontal 'same' conv for ALL planes: one MXU matmul against the
    # block-diagonal I_{TB*C} (x) Kw.
    t = jnp.dot(s_ref[...], kw_ref[...], preferred_element_type=jnp.float32)
    # Vertical 'same' conv fused over the 5 products via I_5 (x) Kh: one dot.
    e = jnp.dot(kh_ref[...], t, preferred_element_type=jnp.float32)

    mu1 = e[0 * H:1 * H, :]
    mu2 = e[1 * H:2 * H, :]
    e11 = e[2 * H:3 * H, :]
    e22 = e[3 * H:4 * H, :]
    e12 = e[4 * H:5 * H, :]

    mu1_sq = mu1 * mu1
    mu2_sq = mu2 * mu2
    mu1_mu2 = mu1 * mu2
    sigma1_sq = e11 - mu1_sq
    sigma2_sq = e22 - mu2_sq
    sigma12 = e12 - mu1_mu2

    num = (2.0 * mu1_mu2 + C1) * (2.0 * sigma12 + C2)
    den = (mu1_sq + mu2_sq + C1) * (sigma1_sq + sigma2_sq + C2)
    # den is bounded below by ~C1*C2 > 0 and the result feeds a mean, so the
    # EUP approximate reciprocal (~2^-12 rel. err.) is plenty.
    ssim_map = num * pl.reciprocal(den, approx=True)

    # Lane-dense per-column partial sums; the tiny (B,)-sized final reduction
    # and 1 - mean happen in the wrapper.
    o_ref[...] = jnp.sum(ssim_map, axis=0, keepdims=True)[None]


def ssim_loss(output, target, window_size=WINDOW_SIZE, size_average=True):
    """Returns 1 - SSIM(output, target), matching SSIMLoss.forward."""
    B, C, H, W = output.shape
    g = _gaussian_1d(window_size, SIGMA)

    TB = _choose_batch_tile(B, C, W)
    nb = B // TB
    L = TB * C * W

    # Trace-time constant conv matrices (zero 'same' padding baked in).
    kh = _band_matrix(H, g)                                   # vertical pass
    kw = _band_matrix(W, g).T                                 # horizontal pass
    # TODO(synk): for large H/W, row-tile H with a window//2 halo and use
    # banded slices of Kh/Kw (not dense blocks) + explicit vmem_limit_bytes;
    # mandatory for v7x's 64 MiB VMEM and for v5e's weaker MXU.
    kh_big = jnp.asarray(np.kron(np.eye(5, dtype=np.float32), kh))       # (5H, 5H)
    kw_big = jnp.asarray(np.kron(np.eye(TB * C, dtype=np.float32), kw))  # (L, L)

    # Lane-dense repack: (B, C, H, W) -> (nb, H, TB*C*W). Wrapper-side
    # transpose so the kernel's lane axis carries batch*channel*width.
    def repack(x):
        x = x.astype(jnp.float32).reshape(nb, TB, C, H, W)
        x = jnp.transpose(x, (0, 3, 1, 2, 4))                 # (nb, H, TB, C, W)
        return x.reshape(nb, H, L)

    x1 = repack(output)
    x2 = repack(target)

    kernel = functools.partial(_ssim_kernel, H=H)

    col_sums = pl.pallas_call(
        kernel,
        out_shape=jax.ShapeDtypeStruct((nb, 1, L), jnp.float32),
        grid=(nb,),
        in_specs=[
            pl.BlockSpec((5 * H, 5 * H), lambda i: (0, 0)),
            pl.BlockSpec((L, L), lambda i: (0, 0)),
            pl.BlockSpec((1, H, L), lambda i: (i, 0, 0)),
            pl.BlockSpec((1, H, L), lambda i: (i, 0, 0)),
        ],
        out_specs=pl.BlockSpec((1, 1, L), lambda i: (i, 0, 0)),
        scratch_shapes=[pltpu.VMEM((5 * H, L), jnp.float32)],
        compiler_params=pltpu.CompilerParams(
            dimension_semantics=("parallel",)),
    )(kh_big, kw_big, x1, x2)

    # col_sums lanes are ordered (tb, c, w) within a step -> flatten to (B, C*W).
    per_batch = jnp.sum(col_sums.reshape(B, C * W), axis=-1)   # (B,)
    if size_average:
        return 1.0 - jnp.sum(per_batch) / np.float32(B * C * H * W)
    # size_average=False: per-batch mean over (C, H, W), i.e.
    # ssim_map.mean(1).mean(1).mean(1) in the PyTorch module.
    return 1.0 - per_batch / np.float32(C * H * W)


if __name__ == "__main__":
    key = jax.random.PRNGKey(0)
    k1, k2 = jax.random.split(key)
    B, C, H, W = 2, 3, 16, 16          # SSIMLoss hardcodes channel=3
    output = jax.random.uniform(k1, (B, C, H, W), dtype=jnp.float32)
    target = jax.random.uniform(k2, (B, C, H, W), dtype=jnp.float32)

    loss = ssim_loss(output, target)
    jax.block_until_ready(loss)
    print("KERNEL_OK")
</pallas_src>

<mosaic_0001>
module attributes {stable_mosaic.version = 11 : i64} {
  func.func @_ssim_kernel(%arg0: i32, %arg1: memref<80x80xf32, #tpu.memory_space<vmem>>, %arg2: memref<48x48xf32, #tpu.memory_space<vmem>>, %arg3: memref<1x16x48xf32, #tpu.memory_space<vmem>>, %arg4: memref<1x16x48xf32, #tpu.memory_space<vmem>>, %arg5: memref<1x1x48xf32, #tpu.memory_space<vmem>>, %arg6: memref<80x48xf32, #tpu.memory_space<vmem>>) attributes {dimension_semantics = [#tpu.dimension_semantics<parallel>], iteration_bounds = array<i64: 2>, scalar_prefetch = 0 : i64, scratch_operands = 1 : i64, tpu.core_type = #tpu.core_type<tc>, window_params = [{pipeline_mode = #tpu.pipeline_mode<synchronous>, transform_indices = @transform_0, window_bounds = array<i64: 80, 80>}, {pipeline_mode = #tpu.pipeline_mode<synchronous>, transform_indices = @transform_1, window_bounds = array<i64: 48, 48>}, {transform_indices = @transform_2, window_bounds = array<i64: 1, 16, 48>}, {transform_indices = @transform_3, window_bounds = array<i64: 1, 16, 48>}, {transform_indices = @transform_4, window_bounds = array<i64: 1, 1, 48>}]} {
    %c0 = arith.constant 0 : index
    %c0_0 = arith.constant 0 : index
    %c0_1 = arith.constant 0 : index
    %0 = vector.load %arg3[%c0, %c0_0, %c0_1] : memref<1x16x48xf32, #tpu.memory_space<vmem>>, vector<1x16x48xf32>
    %1 = vector.shape_cast %0 : vector<1x16x48xf32> to vector<16x48xf32>
    %c0_2 = arith.constant 0 : index
    %c0_3 = arith.constant 0 : index
    %c0_4 = arith.constant 0 : index
    %2 = vector.load %arg4[%c0_2, %c0_3, %c0_4] : memref<1x16x48xf32, #tpu.memory_space<vmem>>, vector<1x16x48xf32>
    %3 = vector.shape_cast %2 : vector<1x16x48xf32> to vector<16x48xf32>
    %c0_5 = arith.constant 0 : index
    %c0_6 = arith.constant 0 : index
    %4 = vector.load %arg6[%c0_5, %c0_6] : memref<80x48xf32, #tpu.memory_space<vmem>>, vector<16x48xf32>
    tpu.vector_store %arg6[%c0_5, %c0_6], %1 {strides = array<i32>} : memref<80x48xf32, #tpu.memory_space<vmem>>, vector<16x48xf32>,
    %c16 = arith.constant 16 : index
    %c0_7 = arith.constant 0 : index
    %5 = vector.load %arg6[%c16, %c0_7] : memref<80x48xf32, #tpu.memory_space<vmem>>, vector<16x48xf32>
    tpu.vector_store %arg6[%c16, %c0_7], %3 {strides = array<i32>} : memref<80x48xf32, #tpu.memory_space<vmem>>, vector<16x48xf32>,
    %6 = arith.mulf %1, %1 : vector<16x48xf32>
    %c32 = arith.constant 32 : index
    %c0_8 = arith.constant 0 : index
    %7 = vector.load %arg6[%c32, %c0_8] : memref<80x48xf32, #tpu.memory_space<vmem>>, vector<16x48xf32>
    tpu.vector_store %arg6[%c32, %c0_8], %6 {strides = array<i32>} : memref<80x48xf32, #tpu.memory_space<vmem>>, vector<16x48xf32>,
    %8 = arith.mulf %3, %3 : vector<16x48xf32>
    %c48 = arith.constant 48 : index
    %c0_9 = arith.constant 0 : index
    %9 = vector.load %arg6[%c48, %c0_9] : memref<80x48xf32, #tpu.memory_space<vmem>>, vector<16x48xf32>
    tpu.vector_store %arg6[%c48, %c0_9], %8 {strides = array<i32>} : memref<80x48xf32, #tpu.memory_space<vmem>>, vector<16x48xf32>,
    %10 = arith.mulf %1, %3 : vector<16x48xf32>
    %c64 = arith.constant 64 : index
    %c0_10 = arith.constant 0 : index
    %11 = vector.load %arg6[%c64, %c0_10] : memref<80x48xf32, #tpu.memory_space<vmem>>, vector<16x48xf32>
    tpu.vector_store %arg6[%c64, %c0_10], %10 {strides = array<i32>} : memref<80x48xf32, #tpu.memory_space<vmem>>, vector<16x48xf32>,
    %c0_11 = arith.constant 0 : index
    %c0_12 = arith.constant 0 : index
    %12 = vector.load %arg6[%c0_11, %c0_12] : memref<80x48xf32, #tpu.memory_space<vmem>>, vector<80x48xf32>
    %c0_13 = arith.constant 0 : index
    %c0_14 = arith.constant 0 : index
    %13 = vector.load %arg2[%c0_13, %c0_14] : memref<48x48xf32, #tpu.memory_space<vmem>>, vector<48x48xf32>
    %cst = arith.constant dense<0.000000e+00> : vector<80x48xf32>
    %14 = tpu.matmul %12, %13, %cst {dimension_numbers = #tpu.dot_dimension_numbers<[1], [0], [0], [1], [0, 0, 1, 1], [], []>} : vector<80x48xf32>, vector<48x48xf32>, vector<80x48xf32> -> vector<80x48xf32>
    %c0_15 = arith.constant 0 : index
    %c0_16 = arith.constant 0 : index
    %15 = vector.load %arg1[%c0_15, %c0_16] : memref<80x80xf32, #tpu.memory_space<vmem>>, vector<80x80xf32>
    %cst_17 = arith.constant dense<0.000000e+00> : vector<80x48xf32>
    %16 = tpu.matmul %15, %14, %cst_17 {dimension_numbers = #tpu.dot_dimension_numbers<[1], [0], [0], [1], [0, 0, 1, 1], [], []>} : vector<80x80xf32>, vector<80x48xf32>, vector<80x48xf32> -> vector<80x48xf32>
    %17 = vector.extract_strided_slice %16 {offsets = [0, 0], sizes = [16, 48], strides = [1, 1]} : vector<80x48xf32> to vector<16x48xf32>
    %18 = vector.extract_strided_slice %16 {offsets = [16, 0], sizes = [16, 48], strides = [1, 1]} : vector<80x48xf32> to vector<16x48xf32>
    %19 = vector.extract_strided_slice %16 {offsets = [32, 0], sizes = [16, 48], strides = [1, 1]} : vector<80x48xf32> to vector<16x48xf32>
    %20 = vector.extract_strided_slice %16 {offsets = [48, 0], sizes = [16, 48], strides = [1, 1]} : vector<80x48xf32> to vector<16x48xf32>
    %21 = vector.extract_strided_slice %16 {offsets = [64, 0], sizes = [16, 48], strides = [1, 1]} : vector<80x48xf32> to vector<16x48xf32>
    %22 = arith.mulf %17, %17 : vector<16x48xf32>
    %23 = arith.mulf %18, %18 : vector<16x48xf32>
    %24 = arith.mulf %17, %18 : vector<16x48xf32>
    %25 = arith.subf %19, %22 : vector<16x48xf32>
    %26 = arith.subf %20, %23 : vector<16x48xf32>
    %27 = arith.subf %21, %24 : vector<16x48xf32>
    %cst_18 = arith.constant 2.000000e+00 : f32
    %28 = vector.broadcast %cst_18 : f32 to vector<16x48xf32>
    %29 = arith.mulf %28, %24 : vector<16x48xf32>
    %cst_19 = arith.constant 9.99999974E-5 : f32
    %30 = vector.broadcast %cst_19 : f32 to vector<16x48xf32>
    %31 = arith.addf %29, %30 : vector<16x48xf32>
    %cst_20 = arith.constant 2.000000e+00 : f32
    %32 = vector.broadcast %cst_20 : f32 to vector<16x48xf32>
    %33 = arith.mulf %32, %27 : vector<16x48xf32>
    %cst_21 = arith.constant 8.99999984E-4 : f32
    %34 = vector.broadcast %cst_21 : f32 to vector<16x48xf32>
    %35 = arith.addf %33, %34 : vector<16x48xf32>
    %36 = arith.mulf %31, %35 : vector<16x48xf32>
    %37 = arith.addf %22, %23 : vector<16x48xf32>
    %cst_22 = arith.constant 9.99999974E-5 : f32
    %38 = vector.broadcast %cst_22 : f32 to vector<16x48xf32>
    %39 = arith.addf %37, %38 : vector<16x48xf32>
    %40 = arith.addf %25, %26 : vector<16x48xf32>
    %cst_23 = arith.constant 8.99999984E-4 : f32
    %41 = vector.broadcast %cst_23 : f32 to vector<16x48xf32>
    %42 = arith.addf %40, %41 : vector<16x48xf32>
    %43 = arith.mulf %39, %42 : vector<16x48xf32>
    %44 = tpu.reciprocal %43 {approx = true} : vector<16x48xf32> -> vector<16x48xf32>
    %45 = arith.mulf %36, %44 : vector<16x48xf32>
    %cst_24 = arith.constant dense<0.000000e+00> : vector<48xf32>
    %46 = vector.multi_reduction <add>, %45, %cst_24 [0] : vector<16x48xf32> to vector<48xf32>
    %47 = vector.shape_cast %46 : vector<48xf32> to vector<1x48xf32>
    %48 = vector.shape_cast %47 : vector<1x48xf32> to vector<1x1x48xf32>
    %c0_25 = arith.constant 0 : index
    %c0_26 = arith.constant 0 : index
    %c0_27 = arith.constant 0 : index
    %49 = vector.load %arg5[%c0_25, %c0_26, %c0_27] : memref<1x1x48xf32, #tpu.memory_space<vmem>>, vector<1x1x48xf32>
    tpu.vector_store %arg5[%c0_25, %c0_26, %c0_27], %48 {strides = array<i32>} : memref<1x1x48xf32, #tpu.memory_space<vmem>>, vector<1x1x48xf32>,
    return
  }
  func.func @transform_0(%arg0: i32) -> (i32, i32) {
    %c0_i32 = arith.constant 0 : i32
    %c0_i32_0 = arith.constant 0 : i32
    %c0_i32_1 = arith.constant 0 : i32
    return %c0_i32, %c0_i32_0 : i32, i32
  }
  func.func @transform_1(%arg0: i32) -> (i32, i32) {
    %c0_i32 = arith.constant 0 : i32
    %c0_i32_0 = arith.constant 0 : i32
    %c0_i32_1 = arith.constant 0 : i32
    return %c0_i32, %c0_i32_0 : i32, i32
  }
  func.func @transform_2(%arg0: i32) -> (i32, i32, i32) {
    %c0_i32 = arith.constant 0 : i32
    %c0_i32_0 = arith.constant 0 : i32
    %c0_i32_1 = arith.constant 0 : i32
    return %arg0, %c0_i32, %c0_i32_0 : i32, i32, i32
  }
  func.func @transform_3(%arg0: i32) -> (i32, i32, i32) {
    %c0_i32 = arith.constant 0 : i32
    %c0_i32_0 = arith.constant 0 : i32
    %c0_i32_1 = arith.constant 0 : i32
    return %arg0, %c0_i32, %c0_i32_0 : i32, i32, i32
  }
  func.func @transform_4(%arg0: i32) -> (i32, i32, i32) {
    %c0_i32 = arith.constant 0 : i32
    %c0_i32_0 = arith.constant 0 : i32
    %c0_i32_1 = arith.constant 0 : i32
    return %arg0, %c0_i32, %c0_i32_0 : i32, i32, i32
  }
}

</mosaic_0001>

<llo_original>
// kernel: tpu_custom_call.1
$region0: #{tpu_custom_call.1}
  #allocation0 [shape = 'u32[]', space=smem, size = 0x4, offset = 0x4, fixed_abs, tag = 'smem constant byte address 0x4 - core index']
  #allocation1 [shape = 'u32[144,128]{1,0:T(1,128)}', space=vmem, size = 0x12000, scoped, tag = 'internal scratch']
  #allocation2 [shape = 'f32[80,48]{1,0:T(8,128)}', space=vmem, size = 0xa000, scoped, tag = 'scratch operand']
  %s0 = inlined_call_operand.hbm [shape: f32[80,80], index: 0, kind: input, shape index: {}]
  %s1 = inlined_call_operand.hbm [shape: f32[48,48], index: 1, kind: input, shape index: {}]
  %s2 = inlined_call_operand.hbm [shape: f32[2,16,48], index: 2, kind: input, shape index: {}]
  %s3 = inlined_call_operand.hbm [shape: f32[2,16,48], index: 3, kind: input, shape index: {}]
  %s4 = inlined_call_operand.hbm [shape: f32[2,1,48], index: 4, kind: output, shape index: {}]
  %s5 = sld [smem:[#allocation0]]
  $region65: #{tpu_custom_call.1} parent=0
    _
  %s7 = ssub.s32 1, %s5
  %s8 = scalar_select 0, %s7, %s5
  $region1: #{tpu_custom_call.1} parent=0
    #allocation3 [shape = 'u8[40960]{0}', space=vmem, size = 0xa000, scoped, tag = 'input window, operand 0, single buffered']
    #allocation4 [shape = 's32[2]{0}', space=sflag, size = 0x8, scoped, tag = 'scoped memory for tpu_custom_call.1']
    #allocation5 [shape = 's32[2]{0}', space=sflag, size = 0x8, scoped, tag = 'scoped memory for tpu_custom_call.1']
    #allocation6 [shape = 'u8[24576]{0}', space=vmem, size = 0x6000, scoped, tag = 'input window, operand 1, single buffered']
    #allocation7 [shape = 's32[1]{0}', space=sflag, size = 0x4, scoped, tag = 'scoped memory for tpu_custom_call.1']
    #allocation8 [shape = 'u8[16384]{0}', space=vmem, size = 0x4000, scoped, tag = 'input window, operand 2']
    #allocation9 [shape = 'u8[16384]{0}', space=vmem, size = 0x4000, scoped, tag = 'input window, operand 3']
    #allocation10 [shape = 'u8[1024]{0}', space=vmem, size = 0x400, scoped, tag = 'output window, operand 0']
    %9 = vsyncpa [#allocation4], 0
    %10 = vsyncpa [#allocation7], 0
    %11 = vsyncpa [#allocation5], 0
    %s12 = scalar_lea.sflag [#allocation5], 1
    %13 = vsyncpa %s12, 0
    loop: start=0, step=1, limit=4
    $region2: #{tpu_custom_call.1} parent=1 // loop_pre_header
      _
    $region3: #{tpu_custom_call.1} parent=1 // loop_header
      %s15 = sphi 0, %s19
      %p16 = scmp.ge.s32.totalorder %s15, 4
      %s23 = sphi 0, %s23
      %s25 = sphi 0, %s23
      %s26 = sphi 0, %s25
      %s40 = sphi 0, %s26
      %s44 = sphi 0, %s44
      %s46 = sphi 0, %s44
      %s47 = sphi 0, %s46
      %s61 = sphi 0, %s47
      %s67 = sphi 0, %s69
      %s70 = sphi 0, %s67
      %s71 = sphi 0, %s70
      %s87 = sphi 0, %s71
      %s93 = sphi 0, %s95
      %s96 = sphi 0, %s93
      %s97 = sphi 0, %s96
      %s113 = sphi 0, %s97
      %s119 = sphi 0, %s121
      %s122 = sphi 0, %s119
      %s123 = sphi 0, %s122
      %s139 = sphi 0, %s123
    $region4: #{tpu_custom_call.1} parent=1 // loop_header_branch
      %18 = sbr.rel (%p16) target = $region8
    $region5: #{tpu_custom_call.1} parent=1 // loop_body
      %s20 = ssub.s32 %s15, 1
      %s21 = ssub.s32 %s15, 2
      %s22 = sadd.s32 %s15, 1
      %s24 = sadd.s32 %s23, 1
      %p27 = scmp.eq.s32.totalorder %s15, 1
      %p28 = scmp.ne.s32.totalorder %s23, %s25
      %p29 = scmp.eq.s32.totalorder %s15, 0
      %p30 = por %p28, %p29
      %p31 = scmp.ne.s32.totalorder %s23, %s25
      %p32 = scmp.eq.s32.totalorder %s20, 1
      %p33 = por %p31, %p32
      %p34 = scmp.ne.s32.totalorder %s25, %s26
      %p35 = scmp.eq.s32.totalorder %s20, 0
      %p36 = por %p34, %p35
      %p37 = scmp.ne.s32.totalorder %s25, %s26
      %p38 = scmp.eq.s32.totalorder %s21, 1
      %p39 = por %p37, %p38
      %p41 = scmp.ne.s32.totalorder %s26, %s40
      %p42 = scmp.eq.s32.totalorder %s21, 0
      %p43 = por %p41, %p42
      %s45 = sadd.s32 %s44, 1
      %p48 = scmp.eq.s32.totalorder %s15, 1
      %p49 = scmp.ne.s32.totalorder %s44, %s46
      %p50 = scmp.eq.s32.totalorder %s15, 0
      %p51 = por %p49, %p50
      %p52 = scmp.ne.s32.totalorder %s44, %s46
      %p53 = scmp.eq.s32.totalorder %s20, 1
      %p54 = por %p52, %p53
      %p55 = scmp.ne.s32.totalorder %s46, %s47
      %p56 = scmp.eq.s32.totalorder %s20, 0
      %p57 = por %p55, %p56
      %p58 = scmp.ne.s32.totalorder %s46, %s47
      %p59 = scmp.eq.s32.totalorder %s21, 1
      %p60 = por %p58, %p59
      %p62 = scmp.ne.s32.totalorder %s47, %s61
      %p63 = scmp.eq.s32.totalorder %s21, 0
      %p64 = por %p62, %p63
      %s65 = ssub.s32 %s15, %s22
      %p66 = scmp.eq.s32.totalorder %s65, 0
      %s68 = sadd.s32 %s67, 1
      %s69 = scalar_select %p66, %s67, %s68
      %p72 = pneg %p66
      %p73 = scmp.eq.s32.totalorder %s15, 1
      %p74 = por %p72, %p73
      %p75 = scmp.ne.s32.totalorder %s67, %s70
      %p76 = scmp.eq.s32.totalorder %s15, 0
      %p77 = por %p75, %p76
      %p78 = scmp.ne.s32.totalorder %s67, %s70
      %p79 = scmp.eq.s32.totalorder %s20, 1
      %p80 = por %p78, %p79
      %p81 = scmp.ne.s32.totalorder %s70, %s71
      %p82 = scmp.eq.s32.totalorder %s20, 0
      %p83 = por %p81, %p82
      %p84 = scmp.ne.s32.totalorder %s70, %s71
      %p85 = scmp.eq.s32.totalorder %s21, 1
      %p86 = por %p84, %p85
      %p88 = scmp.ne.s32.totalorder %s71, %s87
      %p89 = scmp.eq.s32.totalorder %s21, 0
      %p90 = por %p88, %p89
      %s91 = ssub.s32 %s15, %s22
      %p92 = scmp.eq.s32.totalorder %s91, 0
      %s94 = sadd.s32 %s93, 1
      %s95 = scalar_select %p92, %s93, %s94
      %p98 = pneg %p92
      %p99 = scmp.eq.s32.totalorder %s15, 1
      %p100 = por %p98, %p99
      %p101 = scmp.ne.s32.totalorder %s93, %s96
      %p102 = scmp.eq.s32.totalorder %s15, 0
      %p103 = por %p101, %p102
      %p104 = scmp.ne.s32.totalorder %s93, %s96
      %p105 = scmp.eq.s32.totalorder %s20, 1
      %p106 = por %p104, %p105
      %p107 = scmp.ne.s32.totalorder %s96, %s97
      %p108 = scmp.eq.s32.totalorder %s20, 0
      %p109 = por %p107, %p108
      %p110 = scmp.ne.s32.totalorder %s96, %s97
      %p111 = scmp.eq.s32.totalorder %s21, 1
      %p112 = por %p110, %p111
      %p114 = scmp.ne.s32.totalorder %s97, %s113
      %p115 = scmp.eq.s32.totalorder %s21, 0
      %p116 = por %p114, %p115
      %s117 = ssub.s32 %s15, %s22
      %p118 = scmp.eq.s32.totalorder %s117, 0
      %s120 = sadd.s32 %s119, 1
      %s121 = scalar_select %p118, %s119, %s120
      %p124 = pneg %p118
      %p125 = scmp.eq.s32.totalorder %s15, 1
      %p126 = por %p124, %p125
      %p127 = scmp.ne.s32.totalorder %s119, %s122
      %p128 = scmp.eq.s32.totalorder %s15, 0
      %p129 = por %p127, %p128
      %p130 = scmp.ne.s32.totalorder %s119, %s122
      %p131 = scmp.eq.s32.totalorder %s20, 1
      %p132 = por %p130, %p131
      %p133 = scmp.ne.s32.totalorder %s122, %s123
      %p134 = scmp.eq.s32.totalorder %s20, 0
      %p135 = por %p133, %p134
      %p136 = scmp.ne.s32.totalorder %s122, %s123
      %p137 = scmp.eq.s32.totalorder %s21, 1
      %p138 = por %p136, %p137
      %p140 = scmp.ne.s32.totalorder %s123, %s139
      %p141 = scmp.eq.s32.totalorder %s21, 0
      %p142 = por %p140, %p141
      %p143 = scmp.le.s32.totalorder 1, %s15
      %p144 = scmp.lt.s32.totalorder %s15, 3
      %p145 = pnand %p143, %p144
      %p146 = pneg %p145
      // Predicated region
      $region9: #{tpu_custom_call.1} parent=5 // pred_check
        _
      $region10: #{tpu_custom_call.1} parent=5 // pred_check_branch
        %148 = sbr.rel (%p145) target = $region12
      $region11: #{tpu_custom_call.1} parent=5 // pred_region
        %s149 = ssub.s32 %s15, 1
        // Predicated region
        $region13: #{tpu_custom_call.1} parent=11 // pred_check
          %p150 = pneg %p36
        $region14: #{tpu_custom_call.1} parent=11 // pred_check_branch
          %152 = sbr.rel (%p150) target = $region16
        $region15: #{tpu_custom_call.1} parent=11 // pred_region
          %s154 = ssub.s32 1280, 1280
          %155 = vsyncadd [#allocation4], %s154
          %s156 = sshll.u32 [#allocation3], 4
          %s157 = int_to_ptr.vmem [resolvable:$true] %s156
          %162 = dma.hbm_to_vmem [thread:$0]  %s0, 1280, %s157, [#allocation4], 128, 128, 8
        $region16: #{tpu_custom_call.1} parent=11 // pred_fallthru
          _
        // Predicated region
        $region17: #{tpu_custom_call.1} parent=11 // pred_check
          %p163 = pneg %p57
        $region18: #{tpu_custom_call.1} parent=11 // pred_check_branch
          %165 = sbr.rel (%p163) target = $region20
        $region19: #{tpu_custom_call.1} parent=11 // pred_region
          %s167 = ssub.s32 768, 768
          %168 = vsyncadd [#allocation7], %s167
          %s169 = sshll.u32 [#allocation6], 4
          %s170 = int_to_ptr.vmem [resolvable:$true] %s169
          %175 = dma.hbm_to_vmem [thread:$0]  %s1, 768, %s170, [#allocation7], 128, 128, 8
        $region20: #{tpu_custom_call.1} parent=11 // pred_fallthru
          _
      $region12: #{tpu_custom_call.1} parent=5 // pred_fallthru
        _
      %p176 = scmp.lt.s32.totalorder %s15, 2
      // Predicated region
      $region21: #{tpu_custom_call.1} parent=5 // pred_check
        %p177 = pneg %p176
      $region22: #{tpu_custom_call.1} parent=5 // pred_check_branch
        %179 = sbr.rel (%p177) target = $region24
      $region23: #{tpu_custom_call.1} parent=5 // pred_region
        // Predicated region
        $region25: #{tpu_custom_call.1} parent=23 // pred_check
          %p180 = pneg %p77
        $region26: #{tpu_custom_call.1} parent=23 // pred_check_branch
          %182 = sbr.rel (%p180) target = $region28
        $region27: #{tpu_custom_call.1} parent=23 // pred_region
          %s183 = sand.u32 %s15, 1
          %s184 = scalar_lea.sflag [#allocation4], %s183
          %s185 = sand.u32 %s67, 1
          %s186 = smul.addr %s185, 16
          %s187 = scalar_lea.vmem [#allocation8], %s186
          %s189 = ssub.s32 256, 256
          %190 = vsyncadd %s184, %s189
          %s191 = smul.addr %s15, 2
          %s192 = smul.addr %s191, 128
          %s193 = scalar_lea.hbm %s2, %s192
          %s194 = sshll.u32 %s187, 4
          %s195 = int_to_ptr.vmem [resolvable:$true] %s194
          %200 = dma.hbm_to_vmem [thread:$0]  %s193, 256, %s195, %s184, 128, 128, 8
        $region28: #{tpu_custom_call.1} parent=23 // pred_fallthru
          _
        // Predicated region
        $region29: #{tpu_custom_call.1} parent=23 // pred_check
          %p201 = pneg %p103
        $region30: #{tpu_custom_call.1} parent=23 // pred_check_branch
          %203 = sbr.rel (%p201) target = $region32
        $region31: #{tpu_custom_call.1} parent=23 // pred_region
          %s204 = sand.u32 %s15, 1
          %s205 = scalar_lea.sflag [#allocation4], %s204
          %s206 = sand.u32 %s93, 1
          %s207 = smul.addr %s206, 16
          %s208 = scalar_lea.vmem [#allocation9], %s207
          %s210 = ssub.s32 256, 256
          %211 = vsyncadd %s205, %s210
          %s212 = smul.addr %s15, 2
          %s213 = smul.addr %s212, 128
          %s214 = scalar_lea.hbm %s3, %s213
          %s215 = sshll.u32 %s208, 4
          %s216 = int_to_ptr.vmem [resolvable:$true] %s215
          %221 = dma.hbm_to_vmem [thread:$0]  %s214, 256, %s216, %s205, 128, 128, 8
        $region32: #{tpu_custom_call.1} parent=23 // pred_fallthru
          _
      $region24: #{tpu_custom_call.1} parent=5 // pred_fallthru
        _
      %p222 = scmp.le.s32.totalorder 1, %s15
      %p223 = scmp.lt.s32.totalorder %s15, 3
      %p224 = pnand %p222, %p223
      %p225 = pneg %p224
      // Predicated region
      $region33: #{tpu_custom_call.1} parent=5 // pred_check
        _
      $region34: #{tpu_custom_call.1} parent=5 // pred_check_branch
        %227 = sbr.rel (%p224) target = $region36
      $region35: #{tpu_custom_call.1} parent=5 // pred_region
        %s228 = ssub.s32 %s15, 1
        // Predicated region
        $region37: #{tpu_custom_call.1} parent=35 // pred_check
          %p229 = pneg %p36
        $region38: #{tpu_custom_call.1} parent=35 // pred_check_branch
          %231 = sbr.rel (%p229) target = $region40
        $region39: #{tpu_custom_call.1} parent=35 // pred_region
          %232 = dma.done [#allocation4], 1280
        $region40: #{tpu_custom_call.1} parent=35 // pred_fallthru
          _
        // Predicated region
        $region41: #{tpu_custom_call.1} parent=35 // pred_check
          %p233 = pneg %p57
        $region42: #{tpu_custom_call.1} parent=35 // pred_check_branch
          %235 = sbr.rel (%p233) target = $region44
        $region43: #{tpu_custom_call.1} parent=35 // pred_region
          %236 = dma.done [#allocation7], 768
        $region44: #{tpu_custom_call.1} parent=35 // pred_fallthru
          _
        %s237 = sand.u32 %s20, 1
        %s238 = scalar_lea.sflag [#allocation4], %s237
        %s239 = sand.u32 %s70, 1
        %s240 = smul.addr %s239, 16
        %s241 = scalar_lea.vmem [#allocation8], %s240
        // Predicated region
        $region45: #{tpu_custom_call.1} parent=35 // pred_check
          %p242 = pneg %p83
        $region46: #{tpu_custom_call.1} parent=35 // pred_check_branch
          %244 = sbr.rel (%p242) target = $region48
        $region47: #{tpu_custom_call.1} parent=35 // pred_region
          %245 = dma.done %s238, 256
        $region48: #{tpu_custom_call.1} parent=35 // pred_fallthru
          _
        %s246 = sand.u32 %s20, 1
        %s247 = scalar_lea.sflag [#allocation4], %s246
        %s248 = sand.u32 %s96, 1
        %s249 = smul.addr %s248, 16
        %s250 = scalar_lea.vmem [#allocation9], %s249
        // Predicated region
        $region49: #{tpu_custom_call.1} parent=35 // pred_check
          %p251 = pneg %p109
        $region50: #{tpu_custom_call.1} parent=35 // pred_check_branch
          %253 = sbr.rel (%p251) target = $region52
        $region51: #{tpu_custom_call.1} parent=35 // pred_region
          %254 = dma.done %s247, 256
        $region52: #{tpu_custom_call.1} parent=35 // pred_fallthru
          _
        %p255 = pneg %p36
        %p256 = pneg %p33
        %p257 = pneg %p57
        %p258 = pneg %p54
        %s259 = sand.u32 %s20, 1
        %s260 = scalar_lea.sflag [#allocation4], %s259
        %s261 = sand.u32 %s70, 1
        %s262 = smul.addr %s261, 16
        %s263 = scalar_lea.vmem [#allocation8], %s262
        %p264 = pneg %p83
        %p265 = pneg %p80
        %s266 = sand.u32 %s20, 1
        %s267 = scalar_lea.sflag [#allocation4], %s266
        %s268 = sand.u32 %s96, 1
        %s269 = smul.addr %s268, 16
        %s270 = scalar_lea.vmem [#allocation9], %s269
        %p271 = pneg %p109
        %p272 = pneg %p106
        %p273 = pneg %p135
        %p274 = pneg %p132
        %s275 = sand.u32 %s122, 1
        %s276 = scalar_lea.sflag [#allocation5], %s275
        %s277 = sand.u32 %s122, 1
        %s278 = scalar_lea.vmem [#allocation10], %s277
        %v279 = vld [vmem:[%s241] sm:$0xff]
        %v280 = vld [vmem:[%s241 + $0x8] sm:$0xff]
        %v281 = vld [vmem:[%s250] sm:$0xff]
        %v282 = vld [vmem:[%s250 + $0x8] sm:$0xff]
        %vm283 = vcmask 392192
        %284 = vst.msk [vmem:[#allocation2] sm:$0xff] %vm283, %v279
        %285 = vst.msk [vmem:[#allocation2 + $0x8] sm:$0xff] %vm283, %v280
        %286 = vst.msk [vmem:[#allocation2 + $0x10] sm:$0xff] %vm283, %v281
        %287 = vst.msk [vmem:[#allocation2 + $0x18] sm:$0xff] %vm283, %v282
        %v288 = vmul.f32 %v279, %v279
        %v289 = vmul.f32 %v280, %v280
        %290 = vst.msk [vmem:[#allocation2 + $0x20] sm:$0xff] %vm283, %v288
        %291 = vst.msk [vmem:[#allocation2 + $0x28] sm:$0xff] %vm283, %v289
        %v292 = vmul.f32 %v281, %v281
        %v293 = vmul.f32 %v282, %v282
        %294 = vst.msk [vmem:[#allocation2 + $0x30] sm:$0xff] %vm283, %v292
        %295 = vst.msk [vmem:[#allocation2 + $0x38] sm:$0xff] %vm283, %v293
        %v296 = vmul.f32 %v279, %v281
        %v297 = vmul.f32 %v280, %v282
        %298 = vst.msk [vmem:[#allocation2 + $0x40] sm:$0xff] %vm283, %v296
        %299 = vst.msk [vmem:[#allocation2 + $0x48] sm:$0xff] %vm283, %v297
        %v300 = vld [vmem:[#allocation2] sm:$0xff]
        %v301 = vld [vmem:[#allocation2 + $0x8] sm:$0xff]
        %v302 = vld [vmem:[#allocation2 + $0x10] sm:$0xff]
        %v303 = vld [vmem:[#allocation2 + $0x18] sm:$0xff]
        %v304 = vld [vmem:[#allocation2 + $0x20] sm:$0xff]
        %v305 = vld [vmem:[#allocation2 + $0x28] sm:$0xff]
        %v306 = vld [vmem:[#allocation2 + $0x30] sm:$0xff]
        %v307 = vld [vmem:[#allocation2 + $0x38] sm:$0xff]
        %v308 = vld [vmem:[#allocation2 + $0x40] sm:$0xff]
        %v309 = vld [vmem:[#allocation2 + $0x48] sm:$0xff]
        %v310 = vld [vmem:[#allocation6] sm:$0xff]
        %v311 = vld [vmem:[#allocation6 + $0x8] sm:$0xff]
        %v312 = vld [vmem:[#allocation6 + $0x10] sm:$0xff]
        %v313 = vld [vmem:[#allocation6 + $0x18] sm:$0xff]
        %v314 = vld [vmem:[#allocation6 + $0x20] sm:$0xff]
        %v315 = vld [vmem:[#allocation6 + $0x28] sm:$0xff]
        %v317 = vsel %vm283, %v300, 0
        %v320 = vsel %vm283, %v301, 0
        %v323 = vsel %vm283, %v302, 0
        %v326 = vsel %vm283, %v303, 0
        %v329 = vsel %vm283, %v304, 0
        %v332 = vsel %vm283, %v305, 0
        %v335 = vsel %vm283, %v306, 0
        %v338 = vsel %vm283, %v307, 0
        %v341 = vsel %vm283, %v308, 0
        %v344 = vsel %vm283, %v309, 0
        %346 = vmatprep.subr.mxu0 0.0
        %347 = vmatpush1.msra.mxu0 %v310
        %348 = vmatprep.subr.mxu0 0.0
        %349 = vmatpush1.msra.mxu0 %v311
        %350 = vmatprep.subr.mxu0 0.0
        %351 = vmatpush1.msra.mxu0 %v312
        %352 = vmatprep.subr.mxu0 0.0
        %353 = vmatpush1.msra.mxu0 %v313
        %354 = vmatprep.subr.mxu0 0.0
        %355 = vmatpush1.msra.mxu0 %v314
        %356 = vmatprep.subr.mxu0 0.0
        %357 = vmatpush1.msra.mxu0 %v315
        %358 = vmatprep.subr.mxu0 0.0
        %359 = vmatpush1.msra.mxu0 0.0
        %360 = vmatprep.subr.mxu0 0.0
        %361 = vmatpush1.msra.mxu0 0.0
        %362 = vmatprep.subr.mxu0 0.0
        %363 = vmatpush1.msra.mxu0 0.0
        %364 = vmatprep.subr.mxu0 0.0
        %365 = vmatpush1.msra.mxu0 0.0
        %366 = vmatprep.subr.mxu0 0.0
        %367 = vmatpush1.msra.mxu0 0.0
        %368 = vmatprep.subr.mxu0 0.0
        %369 = vmatpush1.msra.mxu0 0.0
        %370 = vmatprep.subr.mxu0 0.0
        %371 = vmatpush1.msra.mxu0 0.0
        %372 = vmatprep.subr.mxu0 0.0
        %373 = vmatpush1.msra.mxu0 0.0
        %374 = vmatprep.subr.mxu0 0.0
        %375 = vmatpush1.msra.mxu0 0.0
        %376 = vmatprep.subr.mxu0 0.0
        %377 = vmatpush1.msra.mxu0 0.0
        %378 = vmatprep.subr.mxu0 0.0
        %379 = vmatpush1.msra.mxu0 0.0
        %380 = vmatprep.subr.mxu0 0.0
        %381 = vmatpush1.msra.mxu0 0.0
        %382 = vmatprep.subr.mxu0 0.0
        %383 = vmatpush1.msra.mxu0 0.0
        %384 = vmatprep.subr.mxu0 0.0
        %385 = vmatpush1.msra.mxu0 0.0
        %386 = vmatprep.subr.mxu0 0.0
        %387 = vmatpush1.msra.mxu0 0.0
        %388 = vmatprep.subr.mxu0 0.0
        %389 = vmatpush1.msra.mxu0 0.0
        %390 = vmatprep.subr.mxu0 0.0
        %391 = vmatpush1.msra.mxu0 0.0
        %392 = vmatprep.subr.mxu0 0.0
        %393 = vmatpush1.msra.mxu0 0.0
        %394 = vmatprep.subr.mxu0 0.0
        %395 = vmatpush1.msra.mxu0 0.0
        %396 = vmatprep.subr.mxu0 0.0
        %397 = vmatpush1.msra.mxu0 0.0
        %398 = vmatprep.subr.mxu0 0.0
        %399 = vmatpush1.msra.mxu0 0.0
        %400 = vmatprep.subr.mxu0 0.0
        %401 = vmatpush1.msra.mxu0 0.0
        %402 = vmatprep.subr.mxu0 0.0
        %403 = vmatpush1.msra.mxu0 0.0
        %404 = vmatprep.subr.mxu0 0.0
        %405 = vmatpush1.msra.mxu0 0.0
        %406 = vmatprep.subr.mxu0 0.0
        %407 = vmatpush1.msra.mxu0 0.0
        %408 = vmatprep.subr.mxu0 0.0
        %409 = vmatpush1.msra.mxu0 0.0
        %410 = vmatprep.mubr.f32.mxu0 0.0
        %411 = vmatmul.mubr.f32.gmra.mrb[0].mxu0 %v317
        %v412 = vpop.f32.mrb[0].mxu0
        %v413 = vadd.f32 0.0, %v412
        %v414 = vpop.f32.mrb[0].mxu0
        %415 = vmatprep.mubr.f32.mxu0 0.0
        %416 = vmatmul.mubr.f32.gmra.mrb[0].mxu0 %v320
        %v417 = vpop.f32.mrb[0].mxu0
        %v418 = vadd.f32 0.0, %v417
        %v419 = vpop.f32.mrb[0].mxu0
        %420 = vmatprep.mubr.f32.mxu0 0.0
        %421 = vmatmul.mubr.f32.gmra.mrb[0].mxu0 %v323
        %v422 = vpop.f32.mrb[0].mxu0
        %v423 = vadd.f32 0.0, %v422
        %v424 = vpop.f32.mrb[0].mxu0
        %425 = vmatprep.mubr.f32.mxu0 0.0
        %426 = vmatmul.mubr.f32.gmra.mrb[0].mxu0 %v326
        %v427 = vpop.f32.mrb[0].mxu0
        %v428 = vadd.f32 0.0, %v427
        %v429 = vpop.f32.mrb[0].mxu0
        %430 = vmatprep.mubr.f32.mxu0 0.0
        %431 = vmatmul.mubr.f32.gmra.mrb[0].mxu0 %v329
        %v432 = vpop.f32.mrb[0].mxu0
        %v433 = vadd.f32 0.0, %v432
        %v434 = vpop.f32.mrb[0].mxu0
        %435 = vmatprep.mubr.f32.mxu0 0.0
        %436 = vmatmul.mubr.f32.gmra.mrb[0].mxu0 %v332
        %v437 = vpop.f32.mrb[0].mxu0
        %v438 = vadd.f32 0.0, %v437
        %v439 = vpop.f32.mrb[0].mxu0
        %440 = vmatprep.mubr.f32.mxu0 0.0
        %441 = vmatmul.mubr.f32.gmra.mrb[0].mxu0 %v335
        %v442 = vpop.f32.mrb[0].mxu0
        %v443 = vadd.f32 0.0, %v442
        %v444 = vpop.f32.mrb[0].mxu0
        %445 = vmatprep.mubr.f32.mxu0 0.0
        %446 = vmatmul.mubr.f32.gmra.mrb[0].mxu0 %v338
        %v447 = vpop.f32.mrb[0].mxu0
        %v448 = vadd.f32 0.0, %v447
        %v449 = vpop.f32.mrb[0].mxu0
        %450 = vmatprep.mubr.f32.mxu0 0.0
        %451 = vmatmul.mubr.f32.gmra.mrb[0].mxu0 %v341
        %v452 = vpop.f32.mrb[0].mxu0
        %v453 = vadd.f32 0.0, %v452
        %v454 = vpop.f32.mrb[0].mxu0
        %455 = vmatprep.mubr.f32.mxu0 0.0
        %456 = vmatmul.mubr.f32.gmra.mrb[0].mxu0 %v344
        %v457 = vpop.f32.mrb[0].mxu0
        %v458 = vadd.f32 0.0, %v457
        %v459 = vpop.f32.mrb[0].mxu0
        %460 = vdwg.mxu0
        %v461 = vld [vmem:[#allocation3] sm:$0xff]
        %v462 = vld [vmem:[#allocation3 + $0x8] sm:$0xff]
        %v463 = vld [vmem:[#allocation3 + $0x10] sm:$0xff]
        %v464 = vld [vmem:[#allocation3 + $0x18] sm:$0xff]
        %v465 = vld [vmem:[#allocation3 + $0x20] sm:$0xff]
        %v466 = vld [vmem:[#allocation3 + $0x28] sm:$0xff]
        %v467 = vld [vmem:[#allocation3 + $0x30] sm:$0xff]
        %v468 = vld [vmem:[#allocation3 + $0x38] sm:$0xff]
        %v469 = vld [vmem:[#allocation3 + $0x40] sm:$0xff]
        %v470 = vld [vmem:[#allocation3 + $0x48] sm:$0xff]
        %vm471 = vcmask 654336
        %v473 = vsel %vm471, %v461, 0
        %v476 = vsel %vm471, %v462, 0
        %v479 = vsel %vm471, %v463, 0
        %v482 = vsel %vm471, %v464, 0
        %v485 = vsel %vm471, %v465, 0
        %v488 = vsel %vm471, %v466, 0
        %v491 = vsel %vm471, %v467, 0
        %v494 = vsel %vm471, %v468, 0
        %v497 = vsel %vm471, %v469, 0
        %v500 = vsel %vm471, %v470, 0
        %502 = vmatprep.subr.mxu0 0.0
        %503 = vmatpush1.msra.mxu0 %v413
        %504 = vmatprep.subr.mxu0 0.0
        %505 = vmatpush1.msra.mxu0 %v418
        %506 = vmatprep.subr.mxu0 0.0
        %507 = vmatpush1.msra.mxu0 %v423
        %508 = vmatprep.subr.mxu0 0.0
        %509 = vmatpush1.msra.mxu0 %v428
        %510 = vmatprep.subr.mxu0 0.0
        %511 = vmatpush1.msra.mxu0 %v433
        %512 = vmatprep.subr.mxu0 0.0
        %513 = vmatpush1.msra.mxu0 %v438
        %514 = vmatprep.subr.mxu0 0.0
        %515 = vmatpush1.msra.mxu0 %v443
        %516 = vmatprep.subr.mxu0 0.0
        %517 = vmatpush1.msra.mxu0 %v448
        %518 = vmatprep.subr.mxu0 0.0
        %519 = vmatpush1.msra.mxu0 %v453
        %520 = vmatprep.subr.mxu0 0.0
        %521 = vmatpush1.msra.mxu0 %v458
        %522 = vmatprep.subr.mxu0 0.0
        %523 = vmatpush1.msra.mxu0 0.0
        %524 = vmatprep.subr.mxu0 0.0
        %525 = vmatpush1.msra.mxu0 0.0
        %526 = vmatprep.subr.mxu0 0.0
        %527 = vmatpush1.msra.mxu0 0.0
        %528 = vmatprep.subr.mxu0 0.0
        %529 = vmatpush1.msra.mxu0 0.0
        %530 = vmatprep.subr.mxu0 0.0
        %531 = vmatpush1.msra.mxu0 0.0
        %532 = vmatprep.subr.mxu0 0.0
        %533 = vmatpush1.msra.mxu0 0.0
        %534 = vmatprep.subr.mxu0 0.0
        %535 = vmatpush1.msra.mxu0 0.0
        %536 = vmatprep.subr.mxu0 0.0
        %537 = vmatpush1.msra.mxu0 0.0
        %538 = vmatprep.subr.mxu0 0.0
        %539 = vmatpush1.msra.mxu0 0.0
        %540 = vmatprep.subr.mxu0 0.0
        %541 = vmatpush1.msra.mxu0 0.0
        %542 = vmatprep.subr.mxu0 0.0
        %543 = vmatpush1.msra.mxu0 0.0
        %544 = vmatprep.subr.mxu0 0.0
        %545 = vmatpush1.msra.mxu0 0.0
        %546 = vmatprep.subr.mxu0 0.0
        %547 = vmatpush1.msra.mxu0 0.0
        %548 = vmatprep.subr.mxu0 0.0
        %549 = vmatpush1.msra.mxu0 0.0
        %550 = vmatprep.subr.mxu0 0.0
        %551 = vmatpush1.msra.mxu0 0.0
        %552 = vmatprep.subr.mxu0 0.0
        %553 = vmatpush1.msra.mxu0 0.0
        %554 = vmatprep.subr.mxu0 0.0
        %555 = vmatpush1.msra.mxu0 0.0
        %556 = vmatprep.subr.mxu0 0.0
        %557 = vmatpush1.msra.mxu0 0.0
        %558 = vmatprep.subr.mxu0 0.0
        %559 = vmatpush1.msra.mxu0 0.0
        %560 = vmatprep.subr.mxu0 0.0
        %561 = vmatpush1.msra.mxu0 0.0
        %562 = vmatprep.subr.mxu0 0.0
        %563 = vmatpush1.msra.mxu0 0.0
        %564 = vmatprep.subr.mxu0 0.0
        %565 = vmatpush1.msra.mxu0 0.0
        %566 = vmatprep.mubr.f32.mxu0 0.0
        %567 = vmatmul.mubr.f32.gmra.mrb[0].mxu0 %v473
        %v568 = vpop.f32.mrb[0].mxu0
        %v569 = vadd.f32 0.0, %v568
        %v570 = vpop.f32.mrb[0].mxu0
        %571 = vmatprep.mubr.f32.mxu0 0.0
        %572 = vmatmul.mubr.f32.gmra.mrb[0].mxu0 %v476
        %v573 = vpop.f32.mrb[0].mxu0
        %v574 = vadd.f32 0.0, %v573
        %v575 = vpop.f32.mrb[0].mxu0
        %576 = vmatprep.mubr.f32.mxu0 0.0
        %577 = vmatmul.mubr.f32.gmra.mrb[0].mxu0 %v479
        %v578 = vpop.f32.mrb[0].mxu0
        %v579 = vadd.f32 0.0, %v578
        %v580 = vpop.f32.mrb[0].mxu0
        %581 = vmatprep.mubr.f32.mxu0 0.0
        %582 = vmatmul.mubr.f32.gmra.mrb[0].mxu0 %v482
        %v583 = vpop.f32.mrb[0].mxu0
        %v584 = vadd.f32 0.0, %v583
        %v585 = vpop.f32.mrb[0].mxu0
        %586 = vmatprep.mubr.f32.mxu0 0.0
        %587 = vmatmul.mubr.f32.gmra.mrb[0].mxu0 %v485
        %v588 = vpop.f32.mrb[0].mxu0
        %v589 = vadd.f32 0.0, %v588
        %v590 = vpop.f32.mrb[0].mxu0
        %591 = vmatprep.mubr.f32.mxu0 0.0
        %592 = vmatmul.mubr.f32.gmra.mrb[0].mxu0 %v488
        %v593 = vpop.f32.mrb[0].mxu0
        %v594 = vadd.f32 0.0, %v593
        %v595 = vpop.f32.mrb[0].mxu0
        %596 = vmatprep.mubr.f32.mxu0 0.0
        %597 = vmatmul.mubr.f32.gmra.mrb[0].mxu0 %v491
        %v598 = vpop.f32.mrb[0].mxu0
        %v599 = vadd.f32 0.0, %v598
        %v600 = vpop.f32.mrb[0].mxu0
        %601 = vmatprep.mubr.f32.mxu0 0.0
        %602 = vmatmul.mubr.f32.gmra.mrb[0].mxu0 %v494
        %v603 = vpop.f32.mrb[0].mxu0
        %v604 = vadd.f32 0.0, %v603
        %v605 = vpop.f32.mrb[0].mxu0
        %606 = vmatprep.mubr.f32.mxu0 0.0
        %607 = vmatmul.mubr.f32.gmra.mrb[0].mxu0 %v497
        %v608 = vpop.f32.mrb[0].mxu0
        %v609 = vadd.f32 0.0, %v608
        %v610 = vpop.f32.mrb[0].mxu0
        %611 = vmatprep.mubr.f32.mxu0 0.0
        %612 = vmatmul.mubr.f32.gmra.mrb[0].mxu0 %v500
        %v613 = vpop.f32.mrb[0].mxu0
        %v614 = vadd.f32 0.0, %v613
        %v615 = vpop.f32.mrb[0].mxu0
        %616 = vdwg.mxu0
        %v617 = vmul.f32 %v569, %v569
        %v618 = vmul.f32 %v574, %v574
        %v619 = vmul.f32 %v579, %v579
        %v620 = vmul.f32 %v584, %v584
        %v621 = vmul.f32 %v569, %v579
        %v622 = vmul.f32 %v574, %v584
        %v623 = vsub.f32 %v589, %v617
        %v624 = vsub.f32 %v594, %v618
        %v625 = vsub.f32 %v599, %v619
        %v626 = vsub.f32 %v604, %v620
        %v627 = vsub.f32 %v609, %v621
        %v628 = vsub.f32 %v614, %v622
        %v629 = vmul.f32 %v621, 2.0
        %v630 = vmul.f32 %v622, 2.0
        %v631 = vadd.f32 %v629, 0.0001
        %v632 = vadd.f32 %v630, 0.0001
        %v633 = vmul.f32 %v627, 2.0
        %v634 = vmul.f32 %v628, 2.0
        %v635 = vadd.f32 %v633, 0.0009
        %v636 = vadd.f32 %v634, 0.0009
        %v637 = vmul.f32 %v631, %v635
        %v638 = vmul.f32 %v632, %v636
        %v639 = vadd.f32 %v617, %v619
        %v640 = vadd.f32 %v618, %v620
        %v641 = vadd.f32 %v639, 0.0001
        %v642 = vadd.f32 %v640, 0.0001
        %v643 = vadd.f32 %v623, %v625
        %v644 = vadd.f32 %v624, %v626
        %v645 = vadd.f32 %v643, 0.0009
        %v646 = vadd.f32 %v644, 0.0009
        %v647 = vmul.f32 %v641, %v645
        %v648 = vmul.f32 %v642, %v646
        %v649 = vrcp.pop %v647
        %v650 = vrcp.pop %v648
        %v651 = vmul.f32 %v637, %v649
        %v652 = vmul.f32 %v638, %v650
        %v653 = vsel %vm283, %v651, 0.0
        %v654 = vsel %vm283, %v652, 0.0
        %v655 = vadd.f32 %v653, %v654
        %v656 = vrot.slane %v655, 4
        %v657 = vadd.f32 %v655, %v656
        %v658 = vrot.slane %v657, 2
        %v659 = vadd.f32 %v657, %v658
        %v660 = vrot.slane %v659, 1
        %v661 = vadd.f32 %v659, %v660
        %vm662 = vcmask 385024
        %663 = vst.msk [vmem:[%s278] sm:$0x1] %vm662, %v661
        %s664 = sand.u32 %s122, 1
        %s665 = scalar_lea.sflag [#allocation5], %s664
        %s666 = sand.u32 %s122, 1
        %s667 = scalar_lea.vmem [#allocation10], %s666
        // Predicated region
        $region53: #{tpu_custom_call.1} parent=35 // pred_check
          %p668 = pneg %p132
        $region54: #{tpu_custom_call.1} parent=35 // pred_check_branch
          %670 = sbr.rel (%p668) target = $region56
        $region55: #{tpu_custom_call.1} parent=35 // pred_region
          %s672 = ssub.s32 16, 16
          %673 = vsyncadd %s665, %s672
          %s674 = smul.addr %s20, 16
          %s675 = scalar_lea.hbm %s4, %s674
          %s677 = sshll.u32 %s667, 4
          %s678 = int_to_ptr.vmem [resolvable:$true] %s677
          %680 = dma.vmem_to_hbm [thread:$0]  %s678, 16, %s675, %s665
        $region56: #{tpu_custom_call.1} parent=35 // pred_fallthru
          _
      $region36: #{tpu_custom_call.1} parent=5 // pred_fallthru
        _
      %p681 = scmp.le.s32.totalorder 2, %s15
      // Predicated region
      $region57: #{tpu_custom_call.1} parent=5 // pred_check
        %p682 = pneg %p681
      $region58: #{tpu_custom_call.1} parent=5 // pred_check_branch
        %684 = sbr.rel (%p682) target = $region60
      $region59: #{tpu_custom_call.1} parent=5 // pred_region
        %s685 = ssub.s32 %s15, 2
        // Predicated region
        $region61: #{tpu_custom_call.1} parent=59 // pred_check
          %p686 = pneg %p138
        $region62: #{tpu_custom_call.1} parent=59 // pred_check_branch
          %688 = sbr.rel (%p686) target = $region64
        $region63: #{tpu_custom_call.1} parent=59 // pred_region
          %s689 = sand.u32 %s123, 1
          %s690 = scalar_lea.sflag [#allocation5], %s689
          %s691 = sand.u32 %s123, 1
          %s692 = scalar_lea.vmem [#allocation10], %s691
          %693 = dma.done %s690, 16
        $region64: #{tpu_custom_call.1} parent=59 // pred_fallthru
          _
      $region60: #{tpu_custom_call.1} parent=5 // pred_fallthru
        _
    $region6: #{tpu_custom_call.1} parent=1 // loop_footer
      %s19 = sadd.s32 1, %s15
    $region7: #{tpu_custom_call.1} parent=1 // loop_footer_branch
      %14 = sbr.rel target = $region3
    $region8: #{tpu_custom_call.1} parent=1 // loop_exit
      _
    %694 = vsyncpa [#allocation4], 1
    %s695 = scalar_lea.sflag [#allocation4], 1
    %696 = vsyncpa %s695, 1
    %697 = vsyncpa [#allocation7], 1
    %698 = vsyncpa [#allocation5], 1
    %s699 = scalar_lea.sflag [#allocation5], 1
    %700 = vsyncpa %s699, 1

</llo_original>
